<compile_context>
chip_gen: v6e
topology: v6e:2x2x1
jax: 0.10.0
libtpu: 0.0.40
codegen_flags: <defaults>
</compile_context>

<pallas_src>
import functools

import jax
import jax.numpy as jnp
from jax.experimental import pallas as pl
from jax.experimental.pallas import tpu as pltpu


# ---------------------------------------------------------------------------
# Per-generation resource / VMEM budgeting
# ---------------------------------------------------------------------------

def _tpu_resources():
    """(physical VMEM bytes, #TensorCores per chip) with safe fallbacks."""
    vmem_cap = 64 * 1024 * 1024          # conservative (v7x-sized) fallback
    cores = 1
    try:
        info = pltpu.get_tpu_info()
        cap = getattr(info, "vmem_capacity_bytes", None)
        if cap:
            vmem_cap = int(cap)
        for attr in ("num_cores", "core_count", "num_tensorcores"):
            val = getattr(info, attr, None)
            if val:
                cores = int(val)
                break
    except Exception:
        pass
    return vmem_cap, cores


def _vmem_budget(vmem_cap):
    """Scoped-VMEM limit and the per-(1,C,THW)-block byte cap.

    The x block is double-buffered for both input and output (≈4x the block in
    VMEM) plus f32 reduction temporaries -> budget vmem_limit/5 per block.
    v5e/v6e (128 MiB) -> ~96 MiB limit / ~19 MiB block;
    v7x (64 MiB)      ->  48 MiB limit / ~9.6 MiB block.
    """
    vmem_limit = min(vmem_cap * 3 // 4, 100 * 1024 * 1024)
    max_block = max(256 * 1024, vmem_limit // 5)
    return vmem_limit, max_block


# ---------------------------------------------------------------------------
# Kernel helpers
# ---------------------------------------------------------------------------

def _stack_avg_max(avg, mx):
    """Build the (C, 2) [avg | max] matrix without a minor-dim concatenate."""
    c = avg.shape[0]
    col = jax.lax.broadcasted_iota(jnp.int32, (c, 2), 1)
    return jnp.where(col == 0, avg, mx)


def _fc2_hmap(pooled, e_mid, w2a_p, w2b):
    """Fused fc2 on the stacked (C, 2) matrix -> sigmoid hmap (C, 1), f32."""
    h = jnp.dot(w2a_p, pooled, preferred_element_type=jnp.float32) + e_mid   # (C16, 2)
    h = jnp.maximum(h, 0.0)
    o2 = jnp.dot(w2b, h, preferred_element_type=jnp.float32)                 # (C, 2)
    out = jnp.sum(o2, axis=1, keepdims=True)          # avg-branch + max-branch
    return 1.0 / (1.0 + jnp.exp(-out))                # sigmoid, (C, 1) f32


# ---------------------------------------------------------------------------
# Kernels
# ---------------------------------------------------------------------------

def _pcs_fused_kernel(inv_hw, x_ref, emid_ref, w2a_p_ref, w2b_ref,
                      xo_ref, hmap_ref):
    """Single-pass kernel: whole (C, HW) slab of one batch element per step."""
    xt = x_ref[0]                                                      # (C, HW) native dtype
    s = jnp.sum(xt, axis=1, keepdims=True, dtype=jnp.float32)          # f32 accumulator
    avg = s * inv_hw
    mx = jnp.max(xt, axis=1, keepdims=True).astype(jnp.float32)

    hmap = _fc2_hmap(_stack_avg_max(avg, mx), emid_ref[0],
                     w2a_p_ref[...], w2b_ref[...])                     # (C, 1) f32
    hmap_ref[0] = hmap                                                 # f32 output

    scale = (1.0 + hmap).astype(xo_ref.dtype)                          # (C, 1)
    xo_ref[0] = xt * scale                                             # one mul / vreg


def _pcs_pool_kernel(inv_hw, hw_total, x_ref, emid_ref, w2a_p_ref, w2b_ref,
                     hmap_ref, sum_acc, max_acc):
    """Pass 1 (cdiv-tiled HW): accumulate sum / max, emit hmap on last tile."""
    hw_i = pl.program_id(1)
    n_hw = pl.num_programs(1)

    @pl.when(hw_i == 0)
    def _init():
        sum_acc[...] = jnp.zeros_like(sum_acc)
        max_acc[...] = jnp.full_like(max_acc, -jnp.inf)

    xt = x_ref[0]                                                      # (C, THW)
    thw = xt.shape[1]
    rem = hw_total % thw                                               # static
    if rem:
        # Tail tile is partial: mask padded (unspecified) lanes for sum & max.
        is_tail = hw_i == n_hw - 1
        lane = jax.lax.broadcasted_iota(jnp.int32, xt.shape, 1)
        valid = jnp.logical_or(jnp.logical_not(is_tail), lane < rem)
        xt_sum = jnp.where(valid, xt, jnp.zeros((), xt.dtype))
        xt_max = jnp.where(valid, xt, jnp.full((), -jnp.inf, xt.dtype))
    else:
        xt_sum = xt
        xt_max = xt

    sum_acc[...] += jnp.sum(xt_sum, axis=1, keepdims=True, dtype=jnp.float32)
    max_acc[...] = jnp.maximum(
        max_acc[...], jnp.max(xt_max, axis=1, keepdims=True).astype(jnp.float32))

    @pl.when(hw_i == n_hw - 1)
    def _finalize():
        avg = sum_acc[...] * inv_hw
        hmap_ref[0] = _fc2_hmap(_stack_avg_max(avg, max_acc[...]), emid_ref[0],
                                w2a_p_ref[...], w2b_ref[...])          # f32


def _pcs_modulate_kernel(x_ref, hmap_ref, xo_ref):
    """Pass 2 (cdiv-tiled HW): xo = x * (1 + hmap); tail padding discarded."""
    scale = (1.0 + hmap_ref[0]).astype(xo_ref.dtype)                   # (C, 1)
    xo_ref[0] = x_ref[0] * scale


# ---------------------------------------------------------------------------
# Wrapper
# ---------------------------------------------------------------------------

def _pick_hw_tile(hw, c, itemsize, max_block_bytes):
    """Full HW if the slab fits the block budget, else the largest 128-multiple."""
    max_elems = max(1, max_block_bytes // (c * itemsize))
    if hw <= max_elems:
        return hw
    return max(128, (max_elems // 128) * 128)


@functools.partial(jax.jit, static_argnames=("max_block_bytes",))
def personalized_channel_selection(x, emb, w1a, w1b, w2a, w2b, *,
                                   max_block_bytes=None):
    """x: (B, C, H, W), emb: (B, E). Returns (x_out, hmap) like the nn.Module."""
    B, C, H, W = x.shape
    HW = H * W
    C16 = w2b.shape[1]
    dtype = x.dtype

    vmem_cap, cores = _tpu_resources()
    vmem_limit, auto_block = _vmem_budget(vmem_cap)
    if max_block_bytes is None:
        max_block_bytes = auto_block

    # ---- hoisted tiny MLPs (XLA, batched over B) ----------------------------
    # PyTorch concatenates [pooled, emb] along channels -> split w2a accordingly.
    w2a_p = w2a[:, :C]                                   # multiplies the pooled half
    w2a_e = w2a[:, C:]                                   # multiplies the fc1(emb) half
    e = jnp.maximum(emb @ w1a.T, 0.0) @ w1b.T            # fc1, (B, C)
    e_mid = (e @ w2a_e.T).astype(jnp.float32)            # (B, C16)
    e_mid = e_mid.reshape(B, C16, 1)                     # column layout for the kernel

    x_flat = x.reshape(B, C, HW)
    itemsize = jnp.dtype(dtype).itemsize
    thw = _pick_hw_tile(HW, C, itemsize, max_block_bytes)

    # v7x megacore: if B alone can't occupy every TensorCore, prefer the
    # two-pass structure whose modulate grid (B, n_hw) is fully parallel.
    if cores > 1 and B < cores and thw >= HW and HW >= 2 * 128:
        t = max(128, (-(-(-(-HW // cores)) // 128)) * 128)   # ceil(HW/cores) -> 128-mult
        t = max(128, ((-(-HW // cores) + 127) // 128) * 128)
        if t >= HW:
            t = max(128, (HW // 2 // 128) * 128)
        thw = t

    n_hw = -(-HW // thw)                                 # cdiv
    inv_hw = 1.0 / float(HW)

    small_specs = [
        pl.BlockSpec((1, C16, 1), lambda b, *_: (b, 0, 0)),   # e_mid
        pl.BlockSpec((C16, C), lambda b, *_: (0, 0)),         # w2a_p
        pl.BlockSpec((C, C16), lambda b, *_: (0, 0)),         # w2b
    ]

    if n_hw == 1:
        # -------- fused single-pass kernel (2 HBM passes over x) -------------
        xo, hmap = pl.pallas_call(
            functools.partial(_pcs_fused_kernel, inv_hw),
            out_shape=(
                jax.ShapeDtypeStruct((B, C, HW), dtype),
                jax.ShapeDtypeStruct((B, C, 1), jnp.float32),
            ),
            grid_spec=pltpu.PrefetchScalarGridSpec(
                num_scalar_prefetch=0,
                grid=(B,),
                in_specs=[pl.BlockSpec((1, C, HW), lambda b: (b, 0, 0))] + small_specs,
                out_specs=[
                    pl.BlockSpec((1, C, HW), lambda b: (b, 0, 0)),
                    pl.BlockSpec((1, C, 1), lambda b: (b, 0, 0)),
                ],
            ),
            compiler_params=pltpu.CompilerParams(
                dimension_semantics=("parallel",),
                vmem_limit_bytes=vmem_limit),
            input_output_aliases={0: 0},               # xo aliases x_flat
        )(x_flat, e_mid, w2a_p, w2b)
    else:
        # -------- pass 1: streaming pooling + tiny MLP -> hmap (f32) ---------
        hmap = pl.pallas_call(
            functools.partial(_pcs_pool_kernel, inv_hw, HW),
            out_shape=jax.ShapeDtypeStruct((B, C, 1), jnp.float32),
            grid_spec=pltpu.PrefetchScalarGridSpec(
                num_scalar_prefetch=0,
                grid=(B, n_hw),
                in_specs=[pl.BlockSpec((1, C, thw), lambda b, k: (b, 0, k))]
                         + small_specs,
                out_specs=pl.BlockSpec((1, C, 1), lambda b, k: (b, 0, 0)),
                scratch_shapes=[pltpu.VMEM((C, 1), jnp.float32),
                                pltpu.VMEM((C, 1), jnp.float32)],
            ),
            compiler_params=pltpu.CompilerParams(
                dimension_semantics=("parallel", "arbitrary"),
                vmem_limit_bytes=vmem_limit),
        )(x_flat, e_mid, w2a_p, w2b)

        # -------- pass 2: streaming modulation xo = x * (1 + hmap) -----------
        xo = pl.pallas_call(
            _pcs_modulate_kernel,
            out_shape=jax.ShapeDtypeStruct((B, C, HW), dtype),
            grid_spec=pltpu.PrefetchScalarGridSpec(
                num_scalar_prefetch=0,
                grid=(B, n_hw),
                in_specs=[
                    pl.BlockSpec((1, C, thw), lambda b, k: (b, 0, k)),
                    pl.BlockSpec((1, C, 1), lambda b, k: (b, 0, 0)),
                ],
                out_specs=pl.BlockSpec((1, C, thw), lambda b, k: (b, 0, k)),
            ),
            compiler_params=pltpu.CompilerParams(
                dimension_semantics=("parallel", "parallel"),
                vmem_limit_bytes=vmem_limit),
            input_output_aliases={0: 0},               # xo aliases x_flat
        )(x_flat, hmap)

    return xo.reshape(B, C, H, W), hmap.reshape(B, C, 1, 1).astype(dtype)


# ---------------------------------------------------------------------------
# Pure-JAX reference (mirror of the PyTorch forward)
# ---------------------------------------------------------------------------

def _reference(x, emb, w1a, w1b, w2a, w2b):
    avg = jnp.mean(x, axis=(2, 3))                          # (B, C)
    mx = jnp.max(x, axis=(2, 3))                            # (B, C)
    e = jnp.maximum(emb @ w1a.T, 0.0) @ w1b.T               # fc1, (B, C)

    def fc2(p):
        h = jnp.concatenate([p, e], axis=1) @ w2a.T
        h = jnp.maximum(h, 0.0)
        return h @ w2b.T

    out = fc2(avg) + fc2(mx)
    hmap = jax.nn.sigmoid(out)[:, :, None, None]            # (B, C, 1, 1)
    return x * hmap + x, hmap


if __name__ == "__main__":
    B, f_dim, emb_dim, H, W = 2, 32, 16, 16, 16

    key = jax.random.PRNGKey(0)
    kx, ke, k1, k2, k3, k4, kx2, kx3 = jax.random.split(key, 8)

    x = jax.random.normal(kx, (B, f_dim, H, W), dtype=jnp.float32)
    emb = jax.random.normal(ke, (B, emb_dim), dtype=jnp.float32)

    # Conv2d(out, in, 1, 1, bias=False) weights, squeezed to (out, in).
    w1a = jax.random.normal(k1, (f_dim, emb_dim), dtype=jnp.float32) * 0.1
    w1b = jax.random.normal(k2, (f_dim, f_dim), dtype=jnp.float32) * 0.1
    w2a = jax.random.normal(k3, (f_dim // 16, 2 * f_dim), dtype=jnp.float32) * 0.1
    w2b = jax.random.normal(k4, (f_dim, f_dim // 16), dtype=jnp.float32) * 0.1

    # Case 1: small spatial extent -> fused single-pass kernel.
    xo, hmap = jax.block_until_ready(
        personalized_channel_selection(x, emb, w1a, w1b, w2a, w2b))
    xo_ref, hmap_ref = _reference(x, emb, w1a, w1b, w2a, w2b)
    assert xo.shape == (B, f_dim, H, W) and hmap.shape == (B, f_dim, 1, 1)
    assert jnp.allclose(xo, xo_ref, rtol=1e-5, atol=1e-5)
    assert jnp.allclose(hmap, hmap_ref, rtol=1e-5, atol=1e-5)

    # Case 2: force the spatially-tiled two-pass path (tight block budget,
    # HW divisible by the tile).
    H2 = W2 = 32
    x2 = jax.random.normal(kx2, (B, f_dim, H2, W2), dtype=jnp.float32)
    xo2, hmap2 = jax.block_until_ready(
        personalized_channel_selection(x2, emb, w1a, w1b, w2a, w2b,
                                       max_block_bytes=16 * 1024))
    xo2_ref, hmap2_ref = _reference(x2, emb, w1a, w1b, w2a, w2b)
    assert xo2.shape == (B, f_dim, H2, W2) and hmap2.shape == (B, f_dim, 1, 1)
    assert jnp.allclose(xo2, xo2_ref, rtol=1e-5, atol=1e-5)
    assert jnp.allclose(hmap2, hmap2_ref, rtol=1e-5, atol=1e-5)

    # Case 3: two-pass path with a partial (masked) tail tile: HW = 480, tile 128.
    H3, W3 = 24, 20
    x3 = jax.random.normal(kx3, (B, f_dim, H3, W3), dtype=jnp.float32)
    xo3, hmap3 = jax.block_until_ready(
        personalized_channel_selection(x3, emb, w1a, w1b, w2a, w2b,
                                       max_block_bytes=16 * 1024))
    xo3_ref, hmap3_ref = _reference(x3, emb, w1a, w1b, w2a, w2b)
    assert xo3.shape == (B, f_dim, H3, W3) and hmap3.shape == (B, f_dim, 1, 1)
    assert jnp.allclose(xo3, xo3_ref, rtol=1e-5, atol=1e-5)
    assert jnp.allclose(hmap3, hmap3_ref, rtol=1e-5, atol=1e-5)

    print("KERNEL_OK")
</pallas_src>

<mosaic_0001>
module attributes {stable_mosaic.version = 11 : i64} {
  func.func @_pcs_fused_kernel(%arg0: i32, %arg1: memref<1x32x256xf32, #tpu.memory_space<vmem>>, %arg2: memref<1x2x1xf32, #tpu.memory_space<vmem>>, %arg3: memref<2x32xf32, #tpu.memory_space<vmem>>, %arg4: memref<32x2xf32, #tpu.memory_space<vmem>>, %arg5: memref<1x32x256xf32, #tpu.memory_space<vmem>>, %arg6: memref<1x32x1xf32, #tpu.memory_space<vmem>>) attributes {dimension_semantics = [#tpu.dimension_semantics<parallel>], iteration_bounds = array<i64: 2>, scalar_prefetch = 0 : i64, scratch_operands = 0 : i64, tpu.core_type = #tpu.core_type<tc>, window_params = [{transform_indices = @transform_0, window_bounds = array<i64: 1, 32, 256>}, {transform_indices = @transform_1, window_bounds = array<i64: 1, 2, 1>}, {pipeline_mode = #tpu.pipeline_mode<synchronous>, transform_indices = @transform_2, window_bounds = array<i64: 2, 32>}, {pipeline_mode = #tpu.pipeline_mode<synchronous>, transform_indices = @transform_3, window_bounds = array<i64: 32, 2>}, {transform_indices = @transform_4, window_bounds = array<i64: 1, 32, 256>}, {transform_indices = @transform_5, window_bounds = array<i64: 1, 32, 1>}]} {
    %c0 = arith.constant 0 : index
    %c0_0 = arith.constant 0 : index
    %c0_1 = arith.constant 0 : index
    %0 = vector.load %arg1[%c0, %c0_0, %c0_1] : memref<1x32x256xf32, #tpu.memory_space<vmem>>, vector<1x32x256xf32>
    %1 = vector.shape_cast %0 : vector<1x32x256xf32> to vector<32x256xf32>
    %cst = arith.constant dense<0.000000e+00> : vector<32xf32>
    %2 = vector.multi_reduction <add>, %1, %cst [1] : vector<32x256xf32> to vector<32xf32>
    %3 = vector.shape_cast %2 : vector<32xf32> to vector<32x1xf32>
    %cst_2 = arith.constant 3.906250e-03 : f32
    %4 = vector.broadcast %cst_2 : f32 to vector<32x1xf32>
    %5 = arith.mulf %3, %4 : vector<32x1xf32>
    %cst_3 = arith.constant dense<0xFF800000> : vector<32xf32>
    %6 = vector.multi_reduction <maximumf>, %1, %cst_3 [1] : vector<32x256xf32> to vector<32xf32>
    %7 = vector.shape_cast %6 : vector<32xf32> to vector<32x1xf32>
    %8 = tpu.iota {dimensions = array<i32: 1>} : vector<32x2xi32>
    %c0_i32 = arith.constant 0 : i32
    %9 = vector.broadcast %c0_i32 : i32 to vector<32x2xi32>
    %10 = arith.cmpi eq, %8, %9 : vector<32x2xi32>
    %11 = vector.shape_cast %5 : vector<32x1xf32> to vector<32x1xf32>
    %12 = vector.broadcast %11 : vector<32x1xf32> to vector<32x2xf32>
    %13 = vector.shape_cast %7 : vector<32x1xf32> to vector<32x1xf32>
    %14 = vector.broadcast %13 : vector<32x1xf32> to vector<32x2xf32>
    %15 = arith.select %10, %12, %14 : vector<32x2xi1>, vector<32x2xf32>
    %c0_4 = arith.constant 0 : index
    %c0_5 = arith.constant 0 : index
    %c0_6 = arith.constant 0 : index
    %16 = vector.load %arg2[%c0_4, %c0_5, %c0_6] : memref<1x2x1xf32, #tpu.memory_space<vmem>>, vector<1x2x1xf32>
    %17 = vector.shape_cast %16 : vector<1x2x1xf32> to vector<2x1xf32>
    %c0_7 = arith.constant 0 : index
    %c0_8 = arith.constant 0 : index
    %18 = vector.load %arg3[%c0_7, %c0_8] : memref<2x32xf32, #tpu.memory_space<vmem>>, vector<2x32xf32>
    %c0_9 = arith.constant 0 : index
    %c0_10 = arith.constant 0 : index
    %19 = vector.load %arg4[%c0_9, %c0_10] : memref<32x2xf32, #tpu.memory_space<vmem>>, vector<32x2xf32>
    %cst_11 = arith.constant dense<0.000000e+00> : vector<2x2xf32>
    %20 = tpu.matmul %18, %15, %cst_11 {dimension_numbers = #tpu.dot_dimension_numbers<[1], [0], [0], [1], [0, 0, 1, 1], [], []>} : vector<2x32xf32>, vector<32x2xf32>, vector<2x2xf32> -> vector<2x2xf32>
    %21 = vector.broadcast %17 : vector<2x1xf32> to vector<2x2xf32>
    %22 = arith.addf %20, %21 : vector<2x2xf32>
    %cst_12 = arith.constant 0.000000e+00 : f32
    %23 = vector.broadcast %cst_12 : f32 to vector<2x2xf32>
    %24 = arith.maximumf %22, %23 : vector<2x2xf32>
    %cst_13 = arith.constant dense<0.000000e+00> : vector<32x2xf32>
    %25 = tpu.matmul %19, %24, %cst_13 {dimension_numbers = #tpu.dot_dimension_numbers<[1], [0], [0], [1], [0, 0, 1, 1], [], []>} : vector<32x2xf32>, vector<2x2xf32>, vector<32x2xf32> -> vector<32x2xf32>
    %cst_14 = arith.constant dense<0.000000e+00> : vector<32xf32>
    %26 = vector.multi_reduction <add>, %25, %cst_14 [1] : vector<32x2xf32> to vector<32xf32>
    %27 = vector.shape_cast %26 : vector<32xf32> to vector<32x1xf32>
    %cst_15 = arith.constant 0.000000e+00 : f32
    %28 = vector.broadcast %cst_15 : f32 to vector<32x1xf32>
    %29 = arith.subf %28, %27 : vector<32x1xf32>
    %30 = math.exp %29 : vector<32x1xf32>
    %cst_16 = arith.constant 1.000000e+00 : f32
    %31 = vector.broadcast %cst_16 : f32 to vector<32x1xf32>
    %32 = arith.addf %31, %30 : vector<32x1xf32>
    %cst_17 = arith.constant 1.000000e+00 : f32
    %33 = vector.broadcast %cst_17 : f32 to vector<32x1xf32>
    %34 = arith.divf %33, %32 : vector<32x1xf32>
    %c0_18 = arith.constant 0 : index
    %c0_19 = arith.constant 0 : index
    %c0_20 = arith.constant 0 : index
    %35 = vector.load %arg6[%c0_18, %c0_19, %c0_20] : memref<1x32x1xf32, #tpu.memory_space<vmem>>, vector<1x32x1xf32>
    %36 = vector.shape_cast %35 : vector<1x32x1xf32> to vector<32x1xf32>
    %37 = vector.shape_cast %34 : vector<32x1xf32> to vector<1x32x1xf32>
    tpu.vector_store %arg6[%c0_18, %c0_19, %c0_20], %37 {strides = array<i32>} : memref<1x32x1xf32, #tpu.memory_space<vmem>>, vector<1x32x1xf32>,
    %cst_21 = arith.constant 1.000000e+00 : f32
    %38 = vector.broadcast %cst_21 : f32 to vector<32x1xf32>
    %39 = arith.addf %38, %34 : vector<32x1xf32>
    %40 = vector.broadcast %39 : vector<32x1xf32> to vector<32x256xf32>
    %41 = arith.mulf %1, %40 : vector<32x256xf32>
    %c0_22 = arith.constant 0 : index
    %c0_23 = arith.constant 0 : index
    %c0_24 = arith.constant 0 : index
    %42 = vector.load %arg5[%c0_22, %c0_23, %c0_24] : memref<1x32x256xf32, #tpu.memory_space<vmem>>, vector<1x32x256xf32>
    %43 = vector.shape_cast %42 : vector<1x32x256xf32> to vector<32x256xf32>
    %44 = vector.shape_cast %41 : vector<32x256xf32> to vector<1x32x256xf32>
    tpu.vector_store %arg5[%c0_22, %c0_23, %c0_24], %44 {strides = array<i32>} : memref<1x32x256xf32, #tpu.memory_space<vmem>>, vector<1x32x256xf32>,
    return
  }
  func.func @transform_0(%arg0: i32) -> (i32, i32, i32) {
    %c0_i32 = arith.constant 0 : i32
    %c0_i32_0 = arith.constant 0 : i32
    %c0_i32_1 = arith.constant 0 : i32
    return %arg0, %c0_i32, %c0_i32_0 : i32, i32, i32
  }
  func.func @transform_1(%arg0: i32) -> (i32, i32, i32) {
    %c0_i32 = arith.constant 0 : i32
    %c0_i32_0 = arith.constant 0 : i32
    %c0_i32_1 = arith.constant 0 : i32
    return %arg0, %c0_i32, %c0_i32_0 : i32, i32, i32
  }
  func.func @transform_2(%arg0: i32) -> (i32, i32) {
    %c0_i32 = arith.constant 0 : i32
    %c0_i32_0 = arith.constant 0 : i32
    %c0_i32_1 = arith.constant 0 : i32
    return %c0_i32, %c0_i32_0 : i32, i32
  }
  func.func @transform_3(%arg0: i32) -> (i32, i32) {
    %c0_i32 = arith.constant 0 : i32
    %c0_i32_0 = arith.constant 0 : i32
    %c0_i32_1 = arith.constant 0 : i32
    return %c0_i32, %c0_i32_0 : i32, i32
  }
  func.func @transform_4(%arg0: i32) -> (i32, i32, i32) {
    %c0_i32 = arith.constant 0 : i32
    %c0_i32_0 = arith.constant 0 : i32
    %c0_i32_1 = arith.constant 0 : i32
    return %arg0, %c0_i32, %c0_i32_0 : i32, i32, i32
  }
  func.func @transform_5(%arg0: i32) -> (i32, i32, i32) {
    %c0_i32 = arith.constant 0 : i32
    %c0_i32_0 = arith.constant 0 : i32
    %c0_i32_1 = arith.constant 0 : i32
    return %arg0, %c0_i32, %c0_i32_0 : i32, i32, i32
  }
}

</mosaic_0001>

<llo_original>
// kernel: personalized_channel_selection.1
$region0: #{personalized_channel_selection.1}
  #allocation0 [shape = 'u32[]', space=smem, size = 0x4, offset = 0x4, fixed_abs, tag = 'smem constant byte address 0x4 - core index']
  #allocation1 [shape = 'u32[144,128]{1,0:T(1,128)}', space=vmem, size = 0x12000, scoped, tag = 'internal scratch']
  %s0 = inlined_call_operand.vmem [shape: f32[2,32,256], index: 0, kind: input, shape index: {}, may-alias: {0,4}]
  %s1 = inlined_call_operand.vmem [shape: f32[2,2,1], index: 1, kind: input, shape index: {}]
  %s2 = inlined_call_operand.vmem [shape: f32[2,32], index: 2, kind: input, shape index: {}]
  %s3 = inlined_call_operand.vmem [shape: f32[32,2], index: 3, kind: input, shape index: {}]
  %s4 = inlined_call_operand.vmem [shape: f32[2,32,256], index: 4, kind: output, shape index: {0}, may-alias: {0,4}]
  %s5 = inlined_call_operand.vmem [shape: f32[2,32,1], index: 5, kind: output, shape index: {1}]
  %6 = xla_tuple %s4, %s5
  %s7 = sld [smem:[#allocation0]]
  $region57: #{personalized_channel_selection.1} parent=0
    _
  %s9 = ssub.s32 1, %s7
  %s10 = scalar_select 0, %s9, %s7
  loop: start=0, step=1, limit=4
  $region2: #{personalized_channel_selection.1} parent=0 // loop_pre_header
    _
  $region3: #{personalized_channel_selection.1} parent=0 // loop_header
    %s12 = sphi 0, %s16
    %p13 = scmp.ge.s32.totalorder %s12, 4
    %s22 = sphi 0, %s24
    %s25 = sphi 0, %s22
    %s26 = sphi 0, %s25
    %s42 = sphi 0, %s26
    %s48 = sphi 0, %s50
    %s51 = sphi 0, %s48
    %s52 = sphi 0, %s51
    %s68 = sphi 0, %s52
    %s72 = sphi 0, %s72
    %s74 = sphi 0, %s72
    %s75 = sphi 0, %s74
    %s89 = sphi 0, %s75
    %s93 = sphi 0, %s93
    %s95 = sphi 0, %s93
    %s96 = sphi 0, %s95
    %s110 = sphi 0, %s96
    %s116 = sphi 0, %s118
    %s119 = sphi 0, %s116
    %s120 = sphi 0, %s119
    %s136 = sphi 0, %s120
    %s142 = sphi 0, %s144
    %s145 = sphi 0, %s142
    %s146 = sphi 0, %s145
    %s162 = sphi 0, %s146
  $region4: #{personalized_channel_selection.1} parent=0 // loop_header_branch
    %15 = sbr.rel (%p13) target = $region8
  $region5: #{personalized_channel_selection.1} parent=0 // loop_body
    %s17 = ssub.s32 %s12, 1
    %s18 = ssub.s32 %s12, 2
    %s19 = sadd.s32 %s12, 1
    %s20 = ssub.s32 %s12, %s19
    %p21 = scmp.eq.s32.totalorder %s20, 0
    %s23 = sadd.s32 %s22, 1
    %s24 = scalar_select %p21, %s22, %s23
    %p27 = pneg %p21
    %p28 = scmp.eq.s32.totalorder %s12, 1
    %p29 = por %p27, %p28
    %p30 = scmp.ne.s32.totalorder %s22, %s25
    %p31 = scmp.eq.s32.totalorder %s12, 0
    %p32 = por %p30, %p31
    %p33 = scmp.ne.s32.totalorder %s22, %s25
    %p34 = scmp.eq.s32.totalorder %s17, 1
    %p35 = por %p33, %p34
    %p36 = scmp.ne.s32.totalorder %s25, %s26
    %p37 = scmp.eq.s32.totalorder %s17, 0
    %p38 = por %p36, %p37
    %p39 = scmp.ne.s32.totalorder %s25, %s26
    %p40 = scmp.eq.s32.totalorder %s18, 1
    %p41 = por %p39, %p40
    %p43 = scmp.ne.s32.totalorder %s26, %s42
    %p44 = scmp.eq.s32.totalorder %s18, 0
    %p45 = por %p43, %p44
    %s46 = ssub.s32 %s12, %s19
    %p47 = scmp.eq.s32.totalorder %s46, 0
    %s49 = sadd.s32 %s48, 1
    %s50 = scalar_select %p47, %s48, %s49
    %p53 = pneg %p47
    %p54 = scmp.eq.s32.totalorder %s12, 1
    %p55 = por %p53, %p54
    %p56 = scmp.ne.s32.totalorder %s48, %s51
    %p57 = scmp.eq.s32.totalorder %s12, 0
    %p58 = por %p56, %p57
    %p59 = scmp.ne.s32.totalorder %s48, %s51
    %p60 = scmp.eq.s32.totalorder %s17, 1
    %p61 = por %p59, %p60
    %p62 = scmp.ne.s32.totalorder %s51, %s52
    %p63 = scmp.eq.s32.totalorder %s17, 0
    %p64 = por %p62, %p63
    %p65 = scmp.ne.s32.totalorder %s51, %s52
    %p66 = scmp.eq.s32.totalorder %s18, 1
    %p67 = por %p65, %p66
    %p69 = scmp.ne.s32.totalorder %s52, %s68
    %p70 = scmp.eq.s32.totalorder %s18, 0
    %p71 = por %p69, %p70
    %s73 = sadd.s32 %s72, 1
    %p76 = scmp.eq.s32.totalorder %s12, 1
    %p77 = scmp.ne.s32.totalorder %s72, %s74
    %p78 = scmp.eq.s32.totalorder %s12, 0
    %p79 = por %p77, %p78
    %p80 = scmp.ne.s32.totalorder %s72, %s74
    %p81 = scmp.eq.s32.totalorder %s17, 1
    %p82 = por %p80, %p81
    %p83 = scmp.ne.s32.totalorder %s74, %s75
    %p84 = scmp.eq.s32.totalorder %s17, 0
    %p85 = por %p83, %p84
    %p86 = scmp.ne.s32.totalorder %s74, %s75
    %p87 = scmp.eq.s32.totalorder %s18, 1
    %p88 = por %p86, %p87
    %p90 = scmp.ne.s32.totalorder %s75, %s89
    %p91 = scmp.eq.s32.totalorder %s18, 0
    %p92 = por %p90, %p91
    %s94 = sadd.s32 %s93, 1
    %p97 = scmp.eq.s32.totalorder %s12, 1
    %p98 = scmp.ne.s32.totalorder %s93, %s95
    %p99 = scmp.eq.s32.totalorder %s12, 0
    %p100 = por %p98, %p99
    %p101 = scmp.ne.s32.totalorder %s93, %s95
    %p102 = scmp.eq.s32.totalorder %s17, 1
    %p103 = por %p101, %p102
    %p104 = scmp.ne.s32.totalorder %s95, %s96
    %p105 = scmp.eq.s32.totalorder %s17, 0
    %p106 = por %p104, %p105
    %p107 = scmp.ne.s32.totalorder %s95, %s96
    %p108 = scmp.eq.s32.totalorder %s18, 1
    %p109 = por %p107, %p108
    %p111 = scmp.ne.s32.totalorder %s96, %s110
    %p112 = scmp.eq.s32.totalorder %s18, 0
    %p113 = por %p111, %p112
    %s114 = ssub.s32 %s12, %s19
    %p115 = scmp.eq.s32.totalorder %s114, 0
    %s117 = sadd.s32 %s116, 1
    %s118 = scalar_select %p115, %s116, %s117
    %p121 = pneg %p115
    %p122 = scmp.eq.s32.totalorder %s12, 1
    %p123 = por %p121, %p122
    %p124 = scmp.ne.s32.totalorder %s116, %s119
    %p125 = scmp.eq.s32.totalorder %s12, 0
    %p126 = por %p124, %p125
    %p127 = scmp.ne.s32.totalorder %s116, %s119
    %p128 = scmp.eq.s32.totalorder %s17, 1
    %p129 = por %p127, %p128
    %p130 = scmp.ne.s32.totalorder %s119, %s120
    %p131 = scmp.eq.s32.totalorder %s17, 0
    %p132 = por %p130, %p131
    %p133 = scmp.ne.s32.totalorder %s119, %s120
    %p134 = scmp.eq.s32.totalorder %s18, 1
    %p135 = por %p133, %p134
    %p137 = scmp.ne.s32.totalorder %s120, %s136
    %p138 = scmp.eq.s32.totalorder %s18, 0
    %p139 = por %p137, %p138
    %s140 = ssub.s32 %s12, %s19
    %p141 = scmp.eq.s32.totalorder %s140, 0
    %s143 = sadd.s32 %s142, 1
    %s144 = scalar_select %p141, %s142, %s143
    %p147 = pneg %p141
    %p148 = scmp.eq.s32.totalorder %s12, 1
    %p149 = por %p147, %p148
    %p150 = scmp.ne.s32.totalorder %s142, %s145
    %p151 = scmp.eq.s32.totalorder %s12, 0
    %p152 = por %p150, %p151
    %p153 = scmp.ne.s32.totalorder %s142, %s145
    %p154 = scmp.eq.s32.totalorder %s17, 1
    %p155 = por %p153, %p154
    %p156 = scmp.ne.s32.totalorder %s145, %s146
    %p157 = scmp.eq.s32.totalorder %s17, 0
    %p158 = por %p156, %p157
    %p159 = scmp.ne.s32.totalorder %s145, %s146
    %p160 = scmp.eq.s32.totalorder %s18, 1
    %p161 = por %p159, %p160
    %p163 = scmp.ne.s32.totalorder %s146, %s162
    %p164 = scmp.eq.s32.totalorder %s18, 0
    %p165 = por %p163, %p164
    %p166 = scmp.le.s32.totalorder 1, %s12
    %p167 = scmp.lt.s32.totalorder %s12, 3
    %p168 = pnand %p166, %p167
    %p169 = pneg %p168
    // Predicated region
    $region9: #{personalized_channel_selection.1} parent=5 // pred_check
      _
    $region10: #{personalized_channel_selection.1} parent=5 // pred_check_branch
      %171 = sbr.rel (%p168) target = $region12
    $region11: #{personalized_channel_selection.1} parent=5 // pred_region
      %s172 = ssub.s32 %s12, 1
      // Predicated region
      $region13: #{personalized_channel_selection.1} parent=11 // pred_check
        %p173 = pneg %p85
      $region14: #{personalized_channel_selection.1} parent=11 // pred_check_branch
        %175 = sbr.rel (%p173) target = $region16
      $region15: #{personalized_channel_selection.1} parent=11 // pred_region
        _
      $region16: #{personalized_channel_selection.1} parent=11 // pred_fallthru
        _
      // Predicated region
      $region17: #{personalized_channel_selection.1} parent=11 // pred_check
        %p176 = pneg %p106
      $region18: #{personalized_channel_selection.1} parent=11 // pred_check_branch
        %178 = sbr.rel (%p176) target = $region20
      $region19: #{personalized_channel_selection.1} parent=11 // pred_region
        _
      $region20: #{personalized_channel_selection.1} parent=11 // pred_fallthru
        _
    $region12: #{personalized_channel_selection.1} parent=5 // pred_fallthru
      _
    %p179 = scmp.lt.s32.totalorder %s12, 2
    // Predicated region
    $region21: #{personalized_channel_selection.1} parent=5 // pred_check
      %p180 = pneg %p179
    $region22: #{personalized_channel_selection.1} parent=5 // pred_check_branch
      %182 = sbr.rel (%p180) target = $region24
    $region23: #{personalized_channel_selection.1} parent=5 // pred_region
      // Predicated region
      $region25: #{personalized_channel_selection.1} parent=23 // pred_check
        %p183 = pneg %p32
      $region26: #{personalized_channel_selection.1} parent=23 // pred_check_branch
        %185 = sbr.rel (%p183) target = $region28
      $region27: #{personalized_channel_selection.1} parent=23 // pred_region
        %p186 = scmp.lt.s32.totalorder %s12, 1
        %s187 = scalar_select %p186, %s12, 1
        %s188 = smul.addr %s187, 8
        %s189 = smul.addr %s188, 8
        %s190 = scalar_lea.vmem %s0, %s189
      $region28: #{personalized_channel_selection.1} parent=23 // pred_fallthru
        _
      // Predicated region
      $region29: #{personalized_channel_selection.1} parent=23 // pred_check
        %p191 = pneg %p58
      $region30: #{personalized_channel_selection.1} parent=23 // pred_check_branch
        %193 = sbr.rel (%p191) target = $region32
      $region31: #{personalized_channel_selection.1} parent=23 // pred_region
        %p194 = scmp.lt.s32.totalorder %s12, 1
        %s195 = scalar_select %p194, %s12, 1
        %s196 = smul.addr %s195, 2
        %s197 = scalar_lea.vmem %s1, %s196
      $region32: #{personalized_channel_selection.1} parent=23 // pred_fallthru
        _
    $region24: #{personalized_channel_selection.1} parent=5 // pred_fallthru
      _
    %p198 = scmp.le.s32.totalorder 1, %s12
    %p199 = scmp.lt.s32.totalorder %s12, 3
    %p200 = pnand %p198, %p199
    %p201 = pneg %p200
    // Predicated region
    $region33: #{personalized_channel_selection.1} parent=5 // pred_check
      _
    $region34: #{personalized_channel_selection.1} parent=5 // pred_check_branch
      %203 = sbr.rel (%p200) target = $region36
    $region35: #{personalized_channel_selection.1} parent=5 // pred_region
      %s204 = ssub.s32 %s12, 1
      %p205 = scmp.lt.s32.totalorder %s17, 1
      %s206 = scalar_select %p205, %s17, 1
      %s207 = smul.addr %s206, 8
      %s208 = smul.addr %s207, 8
      %s209 = scalar_lea.vmem %s0, %s208
      %p210 = pneg %p38
      %p211 = pneg %p35
      %p212 = scmp.lt.s32.totalorder %s17, 1
      %s213 = scalar_select %p212, %s17, 1
      %s214 = smul.addr %s213, 2
      %s215 = scalar_lea.vmem %s1, %s214
      %p216 = pneg %p64
      %p217 = pneg %p61
      %p218 = pneg %p85
      %p219 = pneg %p82
      %p220 = pneg %p106
      %p221 = pneg %p103
      %p222 = pneg %p132
      %p223 = pneg %p129
      %p224 = scmp.lt.s32.totalorder %s17, 1
      %s225 = scalar_select %p224, %s17, 1
      %s226 = smul.addr %s225, 8
      %s227 = smul.addr %s226, 8
      %s228 = scalar_lea.vmem %s4, %s227
      %p229 = pneg %p158
      %p230 = pneg %p155
      %p231 = scmp.lt.s32.totalorder %s17, 1
      %s232 = scalar_select %p231, %s17, 1
      %s233 = smul.addr %s232, 4
      %s234 = smul.addr %s233, 8
      %s235 = scalar_lea.vmem %s5, %s234
      %p236 = scmp.lt.s32.totalorder %s17, 1
      %s237 = scalar_select %p236, %s17, 1
      %s238 = smul.addr %s237, 8
      %s239 = smul.addr %s238, 8
      %s240 = scalar_lea.vmem %s0, %s239
      %p241 = scmp.lt.s32.totalorder %s17, 1
      %s242 = scalar_select %p241, %s17, 1
      %s243 = smul.addr %s242, 2
      %s244 = scalar_lea.vmem %s1, %s243
      %p245 = scmp.lt.s32.totalorder %s17, 1
      %s246 = scalar_select %p245, %s17, 1
      %s247 = smul.addr %s246, 8
      %s248 = smul.addr %s247, 8
      %s249 = scalar_lea.vmem %s4, %s248
      %p250 = scmp.lt.s32.totalorder %s17, 1
      %s251 = scalar_select %p250, %s17, 1
      %s252 = smul.addr %s251, 4
      %s253 = smul.addr %s252, 8
      %s254 = scalar_lea.vmem %s5, %s253
      %v255 = vld [vmem:[%s240] sm:$0xff]
      %v256 = vld [vmem:[%s240 + $0x8] sm:$0xff]
      %v257 = vld [vmem:[%s240 + $0x10] sm:$0xff]
      %v258 = vld [vmem:[%s240 + $0x18] sm:$0xff]
      %v259 = vld [vmem:[%s240 + $0x20] sm:$0xff]
      %v260 = vld [vmem:[%s240 + $0x28] sm:$0xff]
      %v261 = vld [vmem:[%s240 + $0x30] sm:$0xff]
      %v262 = vld [vmem:[%s240 + $0x38] sm:$0xff]
      %v263 = vadd.f32 %v255, %v256
      %264 = vadd.xlane.f32.xlu0 %v263
      %v265 = vpop.xlane.xlu0 %264
      %v266 = vadd.f32 %v257, %v258
      %267 = vadd.xlane.f32.xlu0 %v266
      %v268 = vpop.xlane.xlu0 %267
      %v269 = vadd.f32 %v259, %v260
      %270 = vadd.xlane.f32.xlu0 %v269
      %v271 = vpop.xlane.xlu0 %270
      %v272 = vadd.f32 %v261, %v262
      %273 = vadd.xlane.f32.xlu0 %v272
      %v274 = vpop.xlane.xlu0 %273
      %v275 = vmul.f32 %v265, 0.00390625
      %v276 = vmul.f32 %v268, 0.00390625
      %v277 = vmul.f32 %v271, 0.00390625
      %v278 = vmul.f32 %v274, 0.00390625
      %v279 = vmax.f32 %v255, %v256
      %280 = vmax.xlane.f32.xlu0 %v279
      %v281 = vpop.xlane.xlu0 %280
      %v282 = vmax.f32 %v257, %v258
      %283 = vmax.xlane.f32.xlu0 %v282
      %v284 = vpop.xlane.xlu0 %283
      %v285 = vmax.f32 %v259, %v260
      %286 = vmax.xlane.f32.xlu0 %v285
      %v287 = vpop.xlane.xlu0 %286
      %v288 = vmax.f32 %v261, %v262
      %289 = vmax.xlane.f32.xlu0 %v288
      %v290 = vpop.xlane.xlu0 %289
      %v291 = vlaneseq
      %v292 = vand.u32 %v291, 127
      %vm293 = vcmp.eq.s32.totalorder %v292, 0
      %v294 = vsel %vm293, %v275, %v281
      %v295 = vsel %vm293, %v276, %v284
      %v296 = vsel %vm293, %v277, %v287
      %v297 = vsel %vm293, %v278, %v290
      %v298 = vld [vmem:[%s244] sm:$0x3]
      %v299 = vld [vmem:[%s2] sm:$0x3]
      %v300 = vld [vmem:[%s3] sm:$0xff]
      %v301 = vld [vmem:[%s3 + $0x8] sm:$0xff]
      %v302 = vld [vmem:[%s3 + $0x10] sm:$0xff]
      %v303 = vld [vmem:[%s3 + $0x18] sm:$0xff]
      %305 = vset.pattern.permute.xlu0 0
      %306 = vperm.xlu0 %305, %v298
      %v307 = vpop.permute.xlu0 %306
      %vm309 = vcmask 261120
      %v311 = vsel %vm309, %v299, 0
      %313 = vmatprep.subr.mxu0 0.0
      %314 = vmatpush1.msra.mxu0 0.0
      %315 = vmatprep.subr.mxu0 0.0
      %316 = vmatpush1.msra.mxu0 0.0
      %317 = vmatprep.subr.mxu0 0.0
      %318 = vmatpush1.msra.mxu0 0.0
      %319 = vmatprep.subr.mxu0 0.0
      %320 = vmatpush1.msra.mxu0 0.0
      %321 = vmatprep.subr.mxu0 0.0
      %322 = vmatpush1.msra.mxu0 0.0
      %323 = vmatprep.subr.mxu0 0.0
      %324 = vmatpush1.msra.mxu0 0.0
      %325 = vmatprep.subr.mxu0 0.0
      %326 = vmatpush1.msra.mxu0 0.0
      %327 = vmatprep.subr.mxu0 0.0
      %328 = vmatpush1.msra.mxu0 0.0
      %329 = vmatprep.subr.mxu0 0.0
      %330 = vmatpush1.msra.mxu0 0.0
      %331 = vmatprep.subr.mxu0 0.0
      %332 = vmatpush1.msra.mxu0 0.0
      %333 = vmatprep.subr.mxu0 0.0
      %334 = vmatpush1.msra.mxu0 0.0
      %335 = vmatprep.subr.mxu0 0.0
      %336 = vmatpush1.msra.mxu0 0.0
      %337 = vmatprep.subr.mxu0 0.0
      %338 = vmatpush1.msra.mxu0 %v297
      %339 = vmatprep.subr.mxu0 0.0
      %340 = vmatpush1.msra.mxu0 %v296
      %341 = vmatprep.subr.mxu0 0.0
      %342 = vmatpush1.msra.mxu0 %v295
      %343 = vmatprep.subr.mxu0 0.0
      %344 = vmatpush1.msra.mxu0 %v294
      %345 = vmatprep.subr.mxu0 0.0
      %346 = vmatpush2.msra.mxu0 0.0
      %347 = vmatprep.subr.mxu0 0.0
      %348 = vmatpush2.msra.mxu0 0.0
      %349 = vmatprep.subr.mxu0 0.0
      %350 = vmatpush2.msra.mxu0 0.0
      %351 = vmatprep.subr.mxu0 0.0
      %352 = vmatpush2.msra.mxu0 0.0
      %353 = vmatprep.subr.mxu0 0.0
      %354 = vmatpush2.msra.mxu0 0.0
      %355 = vmatprep.subr.mxu0 0.0
      %356 = vmatpush2.msra.mxu0 0.0
      %357 = vmatprep.subr.mxu0 0.0
      %358 = vmatpush2.msra.mxu0 0.0
      %359 = vmatprep.subr.mxu0 0.0
      %360 = vmatpush2.msra.mxu0 0.0
      %361 = vmatprep.subr.mxu0 0.0
      %362 = vmatpush2.msra.mxu0 0.0
      %363 = vmatprep.subr.mxu0 0.0
      %364 = vmatpush2.msra.mxu0 0.0
      %365 = vmatprep.subr.mxu0 0.0
      %366 = vmatpush2.msra.mxu0 0.0
      %367 = vmatprep.subr.mxu0 0.0
      %368 = vmatpush2.msra.mxu0 0.0
      %369 = vmatprep.subr.mxu0 0.0
      %370 = vmatpush2.msra.mxu0 0.0
      %371 = vmatprep.subr.mxu0 0.0
      %372 = vmatpush2.msra.mxu0 0.0
      %373 = vmatprep.subr.mxu0 0.0
      %374 = vmatpush2.msra.mxu0 0.0
      %375 = vmatprep.subr.mxu0 0.0
      %376 = vmatpush2.msra.mxu0 0.0
      %377 = vmatprep.mubr.f32.mxu0 0.0
      %378 = vmatmul.mubr.f32.gmra.mxu0 %v311
      %v379 = vpop.f32.mrf.mxu0
      %v380 = vadd.f32 %v307, %v379
      %v381 = vpop.f32.mrf.mxu0
      %382 = vdwg.mxu0
      %v383 = vmax.f32 %v380, 0.0
      %vm384 = vcmask 15360
      %v386 = vsel %vm384, %v300, 0
      %v389 = vsel %vm384, %v301, 0
      %v392 = vsel %vm384, %v302, 0
      %v395 = vsel %vm384, %v303, 0
      %vm397 = vcmask 1041408
      %v399 = vsel %vm397, %v383, 0
      %401 = vmatprep.subr.mxu0 0.0
      %402 = vmatpush1.msra.mxu0 0.0
      %403 = vmatprep.subr.mxu0 0.0
      %404 = vmatpush1.msra.mxu0 0.0
      %405 = vmatprep.subr.mxu0 0.0
      %406 = vmatpush1.msra.mxu0 0.0
      %407 = vmatprep.subr.mxu0 0.0
      %408 = vmatpush1.msra.mxu0 0.0
      %409 = vmatprep.subr.mxu0 0.0
      %410 = vmatpush1.msra.mxu0 0.0
      %411 = vmatprep.subr.mxu0 0.0
      %412 = vmatpush1.msra.mxu0 0.0
      %413 = vmatprep.subr.mxu0 0.0
      %414 = vmatpush1.msra.mxu0 0.0
      %415 = vmatprep.subr.mxu0 0.0
      %416 = vmatpush1.msra.mxu0 0.0
      %417 = vmatprep.subr.mxu0 0.0
      %418 = vmatpush1.msra.mxu0 0.0
      %419 = vmatprep.subr.mxu0 0.0
      %420 = vmatpush1.msra.mxu0 0.0
      %421 = vmatprep.subr.mxu0 0.0
      %422 = vmatpush1.msra.mxu0 0.0
      %423 = vmatprep.subr.mxu0 0.0
      %424 = vmatpush1.msra.mxu0 0.0
      %425 = vmatprep.subr.mxu0 0.0
      %426 = vmatpush1.msra.mxu0 0.0
      %427 = vmatprep.subr.mxu0 0.0
      %428 = vmatpush1.msra.mxu0 0.0
      %429 = vmatprep.subr.mxu0 0.0
      %430 = vmatpush1.msra.mxu0 0.0
      %431 = vmatprep.subr.mxu0 0.0
      %432 = vmatpush1.msra.mxu0 %v399
      %433 = vmatprep.subr.mxu0 0.0
      %434 = vmatpush2.msra.mxu0 0.0
      %435 = vmatprep.subr.mxu0 0.0
      %436 = vmatpush2.msra.mxu0 0.0
      %437 = vmatprep.subr.mxu0 0.0
      %438 = vmatpush2.msra.mxu0 0.0
      %439 = vmatprep.subr.mxu0 0.0
      %440 = vmatpush2.msra.mxu0 0.0
      %441 = vmatprep.subr.mxu0 0.0
      %442 = vmatpush2.msra.mxu0 0.0
      %443 = vmatprep.subr.mxu0 0.0
      %444 = vmatpush2.msra.mxu0 0.0
      %445 = vmatprep.subr.mxu0 0.0
      %446 = vmatpush2.msra.mxu0 0.0
      %447 = vmatprep.subr.mxu0 0.0
      %448 = vmatpush2.msra.mxu0 0.0
      %449 = vmatprep.subr.mxu0 0.0
      %450 = vmatpush2.msra.mxu0 0.0
      %451 = vmatprep.subr.mxu0 0.0
      %452 = vmatpush2.msra.mxu0 0.0
      %453 = vmatprep.subr.mxu0 0.0
      %454 = vmatpush2.msra.mxu0 0.0
      %455 = vmatprep.subr.mxu0 0.0
      %456 = vmatpush2.msra.mxu0 0.0
      %457 = vmatprep.subr.mxu0 0.0
      %458 = vmatpush2.msra.mxu0 0.0
      %459 = vmatprep.subr.mxu0 0.0
      %460 = vmatpush2.msra.mxu0 0.0
      %461 = vmatprep.subr.mxu0 0.0
      %462 = vmatpush2.msra.mxu0 0.0
      %463 = vmatprep.subr.mxu0 0.0
      %464 = vmatpush2.msra.mxu0 0.0
      %465 = vmatprep.mubr.f32.mxu0 0.0
      %466 = vmatmul.mubr.f32.gmra.mxu0 %v386
      %v467 = vpop.f32.mrf.mxu0
      %v468 = vadd.f32 0.0, %v467
      %v469 = vpop.f32.mrf.mxu0
      %470 = vmatprep.mubr.f32.mxu0 0.0
      %471 = vmatmul.mubr.f32.gmra.mxu0 %v389
      %v472 = vpop.f32.mrf.mxu0
      %v473 = vadd.f32 0.0, %v472
      %v474 = vpop.f32.mrf.mxu0
      %475 = vmatprep.mubr.f32.mxu0 0.0
      %476 = vmatmul.mubr.f32.gmra.mxu0 %v392
      %v477 = vpop.f32.mrf.mxu0
      %v478 = vadd.f32 0.0, %v477
      %v479 = vpop.f32.mrf.mxu0
      %480 = vmatprep.mubr.f32.mxu0 0.0
      %481 = vmatmul.mubr.f32.gmra.mxu0 %v395
      %v482 = vpop.f32.mrf.mxu0
      %v483 = vadd.f32 0.0, %v482
      %v484 = vpop.f32.mrf.mxu0
      %485 = vdwg.mxu0
      %v486 = vsel %vm384, %v468, 0.0
      %487 = vadd.xlane.f32.xlu0 %v486
      %v488 = vpop.xlane.xlu0 %487
      %v489 = vsel %vm384, %v473, 0.0
      %490 = vadd.xlane.f32.xlu0 %v489
      %v491 = vpop.xlane.xlu0 %490
      %v492 = vsel %vm384, %v478, 0.0
      %493 = vadd.xlane.f32.xlu0 %v492
      %v494 = vpop.xlane.xlu0 %493
      %v495 = vsel %vm384, %v483, 0.0
      %496 = vadd.xlane.f32.xlu0 %v495
      %v497 = vpop.xlane.xlu0 %496
      %v498 = vsub.f32 0.0, %v488
      %v499 = vsub.f32 0.0, %v491
      %v500 = vsub.f32 0.0, %v494
      %v501 = vsub.f32 0.0, %v497
      %v502 = vmul.f32 %v498, 1.442695
      %v503 = vpow.pop %v502
      %v504 = vmul.f32 %v499, 1.442695
      %v505 = vpow.pop %v504
      %v506 = vmul.f32 %v500, 1.442695
      %v507 = vpow.pop %v506
      %v508 = vmul.f32 %v501, 1.442695
      %v509 = vpow.pop %v508
      %v510 = vadd.f32 %v503, 1.0
      %v511 = vadd.f32 %v505, 1.0
      %v512 = vadd.f32 %v507, 1.0
      %v513 = vadd.f32 %v509, 1.0
      %v514 = vrcp.pop %v510
      %v515 = vmul.f32 1.0, %v514
      %v516 = vrcp.pop %v511
      %v517 = vmul.f32 1.0, %v516
      %v518 = vrcp.pop %v512
      %v519 = vmul.f32 1.0, %v518
      %v520 = vrcp.pop %v513
      %v521 = vmul.f32 1.0, %v520
      %vm522 = vcmask 7168
      %523 = vst.msk [vmem:[%s254] sm:$0xff] %vm522, %v515
      %524 = vst.msk [vmem:[%s254 + $0x8] sm:$0xff] %vm522, %v517
      %525 = vst.msk [vmem:[%s254 + $0x10] sm:$0xff] %vm522, %v519
      %526 = vst.msk [vmem:[%s254 + $0x18] sm:$0xff] %vm522, %v521
      %v527 = vadd.f32 %v515, 1.0
      %v528 = vadd.f32 %v517, 1.0
      %v529 = vadd.f32 %v519, 1.0
      %v530 = vadd.f32 %v521, 1.0
      %v531 = vmul.f32 %v255, %v527
      %v532 = vmul.f32 %v256, %v527
      %v533 = vmul.f32 %v257, %v528
      %v534 = vmul.f32 %v258, %v528
      %v535 = vmul.f32 %v259, %v529
      %v536 = vmul.f32 %v260, %v529
      %v537 = vmul.f32 %v261, %v530
      %v538 = vmul.f32 %v262, %v530
      %539 = vst [vmem:[%s249] sm:$0xff] %v531
      %540 = vst [vmem:[%s249 + $0x8] sm:$0xff] %v532
      %541 = vst [vmem:[%s249 + $0x10] sm:$0xff] %v533
      %542 = vst [vmem:[%s249 + $0x18] sm:$0xff] %v534
      %543 = vst [vmem:[%s249 + $0x20] sm:$0xff] %v535
      %544 = vst [vmem:[%s249 + $0x28] sm:$0xff] %v536
      %545 = vst [vmem:[%s249 + $0x30] sm:$0xff] %v537
      %546 = vst [vmem:[%s249 + $0x38] sm:$0xff] %v538
      %p547 = scmp.lt.s32.totalorder %s17, 1
      %s548 = scalar_select %p547, %s17, 1
      %s549 = smul.addr %s548, 8
      %s550 = smul.addr %s549, 8
      %s551 = scalar_lea.vmem %s4, %s550
      %p552 = scmp.lt.s32.totalorder %s17, 1
      %s553 = scalar_select %p552, %s17, 1
      %s554 = smul.addr %s553, 4
      %s555 = smul.addr %s554, 8
      %s556 = scalar_lea.vmem %s5, %s555
      // Predicated region
      $region37: #{personalized_channel_selection.1} parent=35 // pred_check
        %p557 = pneg %p129
      $region38: #{personalized_channel_selection.1} parent=35 // pred_check_branch
        %559 = sbr.rel (%p557) target = $region40
      $region39: #{personalized_channel_selection.1} parent=35 // pred_region
        _
      $region40: #{personalized_channel_selection.1} parent=35 // pred_fallthru
        _
      // Predicated region
      $region41: #{personalized_channel_selection.1} parent=35 // pred_check
        %p560 = pneg %p155
      $region42: #{personalized_channel_selection.1} parent=35 // pred_check_branch
        %562 = sbr.rel (%p560) target = $region44
      $region43: #{personalized_channel_selection.1} parent=35 // pred_region
        _
      $region44: #{personalized_channel_selection.1} parent=35 // pred_fallthru
        _
    $region36: #{personalized_channel_selection.1} parent=5 // pred_fallthru
      _
    %p563 = scmp.le.s32.totalorder 2, %s12
    // Predicated region
    $region45: #{personalized_channel_selection.1} parent=5 // pred_check
      %p564 = pneg %p563
    $region46: #{personalized_channel_selection.1} parent=5 // pred_check_branch
      %566 = sbr.rel (%p564) target = $region48
    $region47: #{personalized_channel_selection.1} parent=5 // pred_region
      %s567 = ssub.s32 %s12, 2
      // Predicated region
      $region49: #{personalized_channel_selection.1} parent=47 // pred_check
        %p568 = pneg %p135
      $region50: #{personalized_channel_selection.1} parent=47 // pred_check_branch
        %570 = sbr.rel (%p568) target = $region52
      $region51: #{personalized_channel_selection.1} parent=47 // pred_region
        %p571 = scmp.lt.s32.totalorder %s18, 1
        %s572 = scalar_select %p571, %s18, 1
        %s573 = smul.addr %s572, 8
        %s574 = smul.addr %s573, 8
        %s575 = scalar_lea.vmem %s4, %s574
      $region52: #{personalized_channel_selection.1} parent=47 // pred_fallthru
        _
      // Predicated region
      $region53: #{personalized_channel_selection.1} parent=47 // pred_check
        %p576 = pneg %p161
      $region54: #{personalized_channel_selection.1} parent=47 // pred_check_branch
        %578 = sbr.rel (%p576) target = $region56
      $region55: #{personalized_channel_selection.1} parent=47 // pred_region
        %p579 = scmp.lt.s32.totalorder %s18, 1
        %s580 = scalar_select %p579, %s18, 1
        %s581 = smul.addr %s580, 4
        %s582 = smul.addr %s581, 8
        %s583 = scalar_lea.vmem %s5, %s582
      $region56: #{personalized_channel_selection.1} parent=47 // pred_fallthru
        _
    $region48: #{personalized_channel_selection.1} parent=5 // pred_fallthru
      _
  $region6: #{personalized_channel_selection.1} parent=0 // loop_footer
    %s16 = sadd.s32 1, %s12
  $region7: #{personalized_channel_selection.1} parent=0 // loop_footer_branch
    %11 = sbr.rel target = $region3
  $region8: #{personalized_channel_selection.1} parent=0 // loop_exit
    _

</llo_original>
